<compile_context>
chip_gen: v7x
topology: tpu7x:2x2x1
jax: 0.10.0
libtpu: 0.0.40
codegen_flags: <defaults>
</compile_context>

<pallas_src>
import jax
import jax.numpy as jnp
import numpy as np
from jax.experimental import pallas as pl
from jax.experimental.pallas import tpu as pltpu


def _round_up(x, m):
    return (x + m - 1) // m * m


def _vmem_limit_bytes():
    # ~3/4 of physical VMEM: ~48 MiB on v7x (64 MiB), ~96 MiB on v5e/v6e (128 MiB).
    try:
        cap = int(pltpu.get_tpu_info().vmem_capacity_bytes)
    except Exception:
        cap = 64 * 1024 * 1024
    return int(min(cap * 3 // 4, 100 * 1024 * 1024))


def make_lstm_kernel(seq_len, t_chunk, b_shard, hidden, vocab):
    """Build the recurrence kernel, closed over static shape parameters."""
    m_rows = t_chunk * b_shard
    full_chunks = (seq_len % t_chunk) == 0

    def kernel(tok_ref, tbl_ref, whh_ref, hlast_ref, h_sc, c_sc, gx_sc):
        c_idx = pl.program_id(1)            # time-chunk index (sequential axis)

        @pl.when(c_idx == 0)
        def _():
            h_sc[...] = jnp.zeros_like(h_sc)
            c_sc[...] = jnp.zeros_like(c_sc)

        # ---- fused embedding gather + input projection (hoisted per chunk) --
        # one_hot(tokens) @ (emb @ W_ih^T + b) selects the pre-projected rows
        # on the MXU: one (M, V) x (V, 4H) bf16 matmul for the whole chunk,
        # accumulated in f32 and staged into VMEM scratch off the recurrent
        # critical path.
        ids = tok_ref[...]                                        # (M, 1) int32
        iota_v = jax.lax.broadcasted_iota(jnp.int32, (m_rows, vocab), 1)
        one_hot = (iota_v == ids).astype(tbl_ref.dtype)           # (M, V) bf16
        gx_sc[...] = jnp.dot(one_hot, tbl_ref[...],
                             preferred_element_type=jnp.float32)  # (M, 4H) f32

        whh = whh_ref[...]                                        # (H, 4H) bf16
        # TODO(synk): verify from the bundle dump that Mosaic keeps this RHS
        # resident across the chunk's steps (else drive the MXU explicitly).

        def step(s, carry):
            h, c = carry
            row = pl.multiple_of(s * b_shard, 8)
            gates = (gx_sc[pl.ds(row, b_shard), :]
                     + jnp.dot(h.astype(whh.dtype), whh,
                               preferred_element_type=jnp.float32))
            i_g = jax.nn.sigmoid(gates[:, 0 * hidden:1 * hidden])
            f_g = jax.nn.sigmoid(gates[:, 1 * hidden:2 * hidden])
            g_g = jnp.tanh(gates[:, 2 * hidden:3 * hidden])
            o_g = jax.nn.sigmoid(gates[:, 3 * hidden:4 * hidden])
            c_new = f_g * c + i_g * g_g
            h_new = o_g * jnp.tanh(c_new)
            return h_new, c_new

        if full_chunks:
            n_steps = t_chunk
        else:
            # Only the final chunk can contain padded steps: skip them by trip
            # count instead of masking every step of every chunk.
            n_steps = jnp.minimum(t_chunk, seq_len - c_idx * t_chunk)

        h, c = jax.lax.fori_loop(0, n_steps, step, (h_sc[...], c_sc[...]))
        h_sc[...] = h
        c_sc[...] = c

        @pl.when(c_idx == pl.num_programs(1) - 1)
        def _():
            hlast_ref[...] = h_sc[...].astype(hlast_ref.dtype)

    return kernel


def text_classifier_forward(com_idx, params, *, t_chunk=32):
    """com_idx: (B, T) int32 token ids. Returns logits (B, num_classes)."""
    emb = params["embedding"]                       # (V, E), row 0 == 0 (pad)
    B, T = com_idx.shape
    V = emb.shape[0]
    H = params["w_hh"].shape[1]

    # Fused gather+projection table: (V, 4H) = emb @ W_ih^T + (b_ih + b_hh),
    # cast to bf16 (MXU operand); the one-hot matmul is exact row selection.
    proj_tbl = (emb @ params["w_ih"].T
                + (params["b_ih"] + params["b_hh"])[None, :]).astype(jnp.bfloat16)
    whh_t = params["w_hh"].T.astype(jnp.bfloat16)   # (H, 4H) bf16

    # Batch shard: pad to a sublane multiple; cap at the MXU height (256).
    b_pad = _round_up(B, 8)
    b_shard = min(b_pad, 256)
    b_pad = _round_up(b_pad, b_shard)

    # Time chunk: multiple of 8, no larger than the (sublane-padded) sequence.
    t_chunk = min(_round_up(t_chunk, 8), _round_up(T, 8))
    t_pad = _round_up(T, t_chunk)

    n_bshard = b_pad // b_shard
    n_chunk = t_pad // t_chunk
    m_rows = t_chunk * b_shard

    # Token ids, time-major, rearranged (cheap: int32 only) so the block for
    # grid point (p, c) is one contiguous (t_chunk*b_shard, 1) slab.
    tok = jnp.pad(com_idx.T.astype(jnp.int32), ((0, t_pad - T), (0, b_pad - B)))
    tok = (tok.reshape(n_chunk, t_chunk, n_bshard, b_shard)
              .transpose(2, 0, 1, 3)
              .reshape(n_bshard * n_chunk * m_rows, 1))

    grid_spec = pltpu.PrefetchScalarGridSpec(
        num_scalar_prefetch=0,
        grid=(n_bshard, n_chunk),
        in_specs=[
            # token-id chunk for (shard p, chunk c)
            pl.BlockSpec((m_rows, 1), lambda p, c: (p * n_chunk + c, 0)),
            # Constant-index tables: fetched once, single-buffered.
            pl.BlockSpec((V, 4 * H), lambda p, c: (0, 0),
                         pipeline_mode=pl.Buffered(1)),
            pl.BlockSpec((H, 4 * H), lambda p, c: (0, 0),
                         pipeline_mode=pl.Buffered(1)),
        ],
        out_specs=pl.BlockSpec((b_shard, H), lambda p, c: (p, 0)),
        scratch_shapes=[
            pltpu.VMEM((b_shard, H), jnp.float32),        # h state
            pltpu.VMEM((b_shard, H), jnp.float32),        # c state
            pltpu.VMEM((m_rows, 4 * H), jnp.float32),     # hoisted gx chunk
        ],
    )

    h_last = pl.pallas_call(
        make_lstm_kernel(T, t_chunk, b_shard, H, V),
        out_shape=jax.ShapeDtypeStruct((b_pad, H), jnp.float32),
        grid_spec=grid_spec,
        compiler_params=pltpu.CompilerParams(
            dimension_semantics=("parallel", "arbitrary"),
            vmem_limit_bytes=_vmem_limit_bytes()),
    )(tok, proj_tbl, whh_t)

    # Final Linear: used once on h_last -> plain XLA matmul outside the kernel.
    return h_last[:B] @ params["w_fc"].T + params["b_fc"]


def reference_forward(com_idx, params):
    """Pure-JAX f32 reference matching PyTorch LSTM semantics (gates i,f,g,o)."""
    emb = params["embedding"]
    x = jnp.take(emb, com_idx, axis=0)              # (B, T, E)
    B, T, E = x.shape
    H = params["w_hh"].shape[1]
    w_ih, w_hh = params["w_ih"], params["w_hh"]
    b = params["b_ih"] + params["b_hh"]

    def step(carry, x_t):
        h, c = carry
        gates = x_t @ w_ih.T + h @ w_hh.T + b
        i = jax.nn.sigmoid(gates[:, 0 * H:1 * H])
        f = jax.nn.sigmoid(gates[:, 1 * H:2 * H])
        g = jnp.tanh(gates[:, 2 * H:3 * H])
        o = jax.nn.sigmoid(gates[:, 3 * H:4 * H])
        c = f * c + i * g
        h = o * jnp.tanh(c)
        return (h, c), None

    h0 = jnp.zeros((B, H), jnp.float32)
    c0 = jnp.zeros((B, H), jnp.float32)
    (h_last, _), _ = jax.lax.scan(step, (h0, c0), jnp.transpose(x, (1, 0, 2)))
    return h_last @ params["w_fc"].T + params["b_fc"]


def init_params(key, vocab_size, embedding_dim, hidden_dim, num_classes):
    ks = jax.random.split(key, 7)
    scale = 0.1
    emb = scale * jax.random.normal(ks[0], (vocab_size, embedding_dim), jnp.float32)
    emb = emb.at[0].set(0.0)                        # padding_idx=0
    return {
        "embedding": emb,
        "w_ih": scale * jax.random.normal(ks[1], (4 * hidden_dim, embedding_dim), jnp.float32),
        "w_hh": scale * jax.random.normal(ks[2], (4 * hidden_dim, hidden_dim), jnp.float32),
        "b_ih": scale * jax.random.normal(ks[3], (4 * hidden_dim,), jnp.float32),
        "b_hh": scale * jax.random.normal(ks[4], (4 * hidden_dim,), jnp.float32),
        "w_fc": scale * jax.random.normal(ks[5], (num_classes, hidden_dim), jnp.float32),
        "b_fc": scale * jax.random.normal(ks[6], (num_classes,), jnp.float32),
    }


if __name__ == "__main__":
    # Small shapes consistent with the module's forward; hidden_dim kept
    # lane-aligned (128) so gate slices fall on lane boundaries.
    vocab_size, embedding_dim, hidden_dim, num_classes = 256, 128, 128, 2
    batch, seq = 2, 8

    key = jax.random.PRNGKey(0)
    k_params, k_idx = jax.random.split(key)
    params = init_params(k_params, vocab_size, embedding_dim, hidden_dim, num_classes)
    com_idx = jax.random.randint(k_idx, (batch, seq), 0, vocab_size, dtype=jnp.int32)

    logits = jax.block_until_ready(text_classifier_forward(com_idx, params))
    ref = jax.block_until_ready(reference_forward(com_idx, params))

    # Tolerance loosened vs. the all-f32 version because the MXU operands
    # (projection table, W_hh, h) are bf16 with f32 accumulation.
    np.testing.assert_allclose(np.asarray(logits), np.asarray(ref),
                               rtol=3e-2, atol=3e-2)
    assert logits.shape == (batch, num_classes)
    print("KERNEL_OK")
</pallas_src>

<mosaic_0001>
module attributes {stable_mosaic.version = 11 : i64} {
  func.func @kernel(%arg0: i32, %arg1: i32, %arg2: memref<64x1xi32, #tpu.memory_space<vmem>>, %arg3: memref<256x512xbf16, #tpu.memory_space<vmem>>, %arg4: memref<128x512xbf16, #tpu.memory_space<vmem>>, %arg5: memref<8x128xf32, #tpu.memory_space<vmem>>, %arg6: memref<8x128xf32, #tpu.memory_space<vmem>>, %arg7: memref<8x128xf32, #tpu.memory_space<vmem>>, %arg8: memref<64x512xf32, #tpu.memory_space<vmem>>) attributes {dimension_semantics = [#tpu.dimension_semantics<parallel>, #tpu.dimension_semantics<arbitrary>], iteration_bounds = array<i64: 1, 1>, scalar_prefetch = 0 : i64, scratch_operands = 3 : i64, tpu.core_type = #tpu.core_type<tc>, window_params = [{transform_indices = @transform_0, window_bounds = array<i64: 64, 1>}, {pipeline_mode = #tpu.pipeline_mode<synchronous>, transform_indices = @transform_1, window_bounds = array<i64: 256, 512>}, {pipeline_mode = #tpu.pipeline_mode<synchronous>, transform_indices = @transform_2, window_bounds = array<i64: 128, 512>}, {transform_indices = @transform_3, window_bounds = array<i64: 8, 128>}]} {
    %c0_i32 = arith.constant 0 : i32
    %0 = arith.cmpi eq, %arg1, %c0_i32 : i32
    %1 = arith.extui %0 : i1 to i32
    %c0_i32_0 = arith.constant 0 : i32
    %2 = arith.cmpi ne, %1, %c0_i32_0 : i32
    scf.if %2 {
      %cst_20 = arith.constant 0.000000e+00 : f32
      %23 = vector.broadcast %cst_20 : f32 to vector<8x128xf32>
      %c0_21 = arith.constant 0 : index
      %c0_22 = arith.constant 0 : index
      %24 = vector.load %arg6[%c0_21, %c0_22] : memref<8x128xf32, #tpu.memory_space<vmem>>, vector<8x128xf32>
      tpu.vector_store %arg6[%c0_21, %c0_22], %23 {strides = array<i32>} : memref<8x128xf32, #tpu.memory_space<vmem>>, vector<8x128xf32>,
      %cst_23 = arith.constant 0.000000e+00 : f32
      %25 = vector.broadcast %cst_23 : f32 to vector<8x128xf32>
      %c0_24 = arith.constant 0 : index
      %c0_25 = arith.constant 0 : index
      %26 = vector.load %arg7[%c0_24, %c0_25] : memref<8x128xf32, #tpu.memory_space<vmem>>, vector<8x128xf32>
      tpu.vector_store %arg7[%c0_24, %c0_25], %25 {strides = array<i32>} : memref<8x128xf32, #tpu.memory_space<vmem>>, vector<8x128xf32>,
    } else {
    }
    %c0 = arith.constant 0 : index
    %c0_1 = arith.constant 0 : index
    %3 = vector.load %arg2[%c0, %c0_1] : memref<64x1xi32, #tpu.memory_space<vmem>>, vector<64x1xi32>
    %4 = tpu.iota {dimensions = array<i32: 1>} : vector<64x256xi32>
    %5 = vector.broadcast %3 : vector<64x1xi32> to vector<64x256xi32>
    %6 = arith.cmpi eq, %4, %5 : vector<64x256xi32>
    %7 = arith.extui %6 : vector<64x256xi1> to vector<64x256xi32>
    %8 = arith.sitofp %7 : vector<64x256xi32> to vector<64x256xf32>
    %9 = arith.truncf %8 : vector<64x256xf32> to vector<64x256xbf16>
    %c0_2 = arith.constant 0 : index
    %c0_3 = arith.constant 0 : index
    %10 = vector.load %arg3[%c0_2, %c0_3] : memref<256x512xbf16, #tpu.memory_space<vmem>>, vector<256x512xbf16>
    %cst = arith.constant dense<0.000000e+00> : vector<64x512xf32>
    %11 = tpu.matmul %9, %10, %cst {dimension_numbers = #tpu.dot_dimension_numbers<[1], [0], [0], [1], [0, 0, 1, 1], [], []>} : vector<64x256xbf16>, vector<256x512xbf16>, vector<64x512xf32> -> vector<64x512xf32>
    %c0_4 = arith.constant 0 : index
    %c0_5 = arith.constant 0 : index
    %12 = vector.load %arg8[%c0_4, %c0_5] : memref<64x512xf32, #tpu.memory_space<vmem>>, vector<64x512xf32>
    tpu.vector_store %arg8[%c0_4, %c0_5], %11 {strides = array<i32>} : memref<64x512xf32, #tpu.memory_space<vmem>>, vector<64x512xf32>,
    %c0_6 = arith.constant 0 : index
    %c0_7 = arith.constant 0 : index
    %13 = vector.load %arg4[%c0_6, %c0_7] : memref<128x512xbf16, #tpu.memory_space<vmem>>, vector<128x512xbf16>
    %c0_8 = arith.constant 0 : index
    %c0_9 = arith.constant 0 : index
    %14 = vector.load %arg6[%c0_8, %c0_9] : memref<8x128xf32, #tpu.memory_space<vmem>>, vector<8x128xf32>
    %c0_10 = arith.constant 0 : index
    %c0_11 = arith.constant 0 : index
    %15 = vector.load %arg7[%c0_10, %c0_11] : memref<8x128xf32, #tpu.memory_space<vmem>>, vector<8x128xf32>
    %c0_i32_12 = arith.constant 0 : i32
    %c8_i32 = arith.constant 8 : i32
    %16 = arith.addi %c0_i32_12, %c8_i32 : i32
    %c1_i32 = arith.constant 1 : i32
    %17:2 = scf.for %arg9 = %c0_i32_12 to %16 step %c1_i32 iter_args(%arg10 = %14, %arg11 = %15) -> (vector<8x128xf32>, vector<8x128xf32>)  : i32 {
      %c8_i32_20 = arith.constant 8 : i32
      %23 = arith.muli %arg9, %c8_i32_20 : i32
      %24 = tpu.assume_multiple %23, 8 : i32
      %25 = arith.index_cast %24 : i32 to index
      %c0_21 = arith.constant 0 : index
      %26 = vector.load %arg8[%25, %c0_21] : memref<64x512xf32, #tpu.memory_space<vmem>>, vector<8x512xf32>
      %27 = arith.truncf %arg10 : vector<8x128xf32> to vector<8x128xbf16>
      %cst_22 = arith.constant dense<0.000000e+00> : vector<8x512xf32>
      %28 = tpu.matmul %27, %13, %cst_22 {dimension_numbers = #tpu.dot_dimension_numbers<[1], [0], [0], [1], [0, 0, 1, 1], [], []>} : vector<8x128xbf16>, vector<128x512xbf16>, vector<8x512xf32> -> vector<8x512xf32>
      %29 = arith.addf %26, %28 : vector<8x512xf32>
      %30 = vector.extract_strided_slice %29 {offsets = [0, 0], sizes = [8, 128], strides = [1, 1]} : vector<8x512xf32> to vector<8x128xf32>
      %31 = arith.negf %30 : vector<8x128xf32>
      %32 = math.exp %31 : vector<8x128xf32>
      %cst_23 = arith.constant 1.000000e+00 : f32
      %33 = vector.broadcast %cst_23 : f32 to vector<8x128xf32>
      %34 = arith.addf %33, %32 : vector<8x128xf32>
      %35 = arith.divf %33, %34 : vector<8x128xf32>
      %36 = vector.extract_strided_slice %29 {offsets = [0, 128], sizes = [8, 128], strides = [1, 1]} : vector<8x512xf32> to vector<8x128xf32>
      %37 = arith.negf %36 : vector<8x128xf32>
      %38 = math.exp %37 : vector<8x128xf32>
      %cst_24 = arith.constant 1.000000e+00 : f32
      %39 = vector.broadcast %cst_24 : f32 to vector<8x128xf32>
      %40 = arith.addf %39, %38 : vector<8x128xf32>
      %41 = arith.divf %39, %40 : vector<8x128xf32>
      %42 = vector.extract_strided_slice %29 {offsets = [0, 256], sizes = [8, 128], strides = [1, 1]} : vector<8x512xf32> to vector<8x128xf32>
      %43 = math.tanh %42 : vector<8x128xf32>
      %44 = vector.extract_strided_slice %29 {offsets = [0, 384], sizes = [8, 128], strides = [1, 1]} : vector<8x512xf32> to vector<8x128xf32>
      %45 = arith.negf %44 : vector<8x128xf32>
      %46 = math.exp %45 : vector<8x128xf32>
      %cst_25 = arith.constant 1.000000e+00 : f32
      %47 = vector.broadcast %cst_25 : f32 to vector<8x128xf32>
      %48 = arith.addf %47, %46 : vector<8x128xf32>
      %49 = arith.divf %47, %48 : vector<8x128xf32>
      %50 = arith.mulf %41, %arg11 : vector<8x128xf32>
      %51 = arith.mulf %35, %43 : vector<8x128xf32>
      %52 = arith.addf %50, %51 : vector<8x128xf32>
      %53 = math.tanh %52 : vector<8x128xf32>
      %54 = arith.mulf %49, %53 : vector<8x128xf32>
      scf.yield %54, %52 : vector<8x128xf32>, vector<8x128xf32>
    }
    %c8_i32_13 = arith.constant 8 : i32
    %c0_14 = arith.constant 0 : index
    %c0_15 = arith.constant 0 : index
    %18 = vector.load %arg6[%c0_14, %c0_15] : memref<8x128xf32, #tpu.memory_space<vmem>>, vector<8x128xf32>
    tpu.vector_store %arg6[%c0_14, %c0_15], %17#0 {strides = array<i32>} : memref<8x128xf32, #tpu.memory_space<vmem>>, vector<8x128xf32>,
    %c0_16 = arith.constant 0 : index
    %c0_17 = arith.constant 0 : index
    %19 = vector.load %arg7[%c0_16, %c0_17] : memref<8x128xf32, #tpu.memory_space<vmem>>, vector<8x128xf32>
    tpu.vector_store %arg7[%c0_16, %c0_17], %17#1 {strides = array<i32>} : memref<8x128xf32, #tpu.memory_space<vmem>>, vector<8x128xf32>,
    %c0_i32_18 = arith.constant 0 : i32
    %20 = arith.cmpi eq, %arg1, %c0_i32_18 : i32
    %21 = arith.extui %20 : i1 to i32
    %c0_i32_19 = arith.constant 0 : i32
    %22 = arith.cmpi ne, %21, %c0_i32_19 : i32
    scf.if %22 {
      %c0_20 = arith.constant 0 : index
      %c0_21 = arith.constant 0 : index
      %23 = vector.load %arg6[%c0_20, %c0_21] : memref<8x128xf32, #tpu.memory_space<vmem>>, vector<8x128xf32>
      %c0_22 = arith.constant 0 : index
      %c0_23 = arith.constant 0 : index
      %24 = vector.load %arg5[%c0_22, %c0_23] : memref<8x128xf32, #tpu.memory_space<vmem>>, vector<8x128xf32>
      tpu.vector_store %arg5[%c0_22, %c0_23], %23 {strides = array<i32>} : memref<8x128xf32, #tpu.memory_space<vmem>>, vector<8x128xf32>,
    } else {
    }
    return
  }
  func.func @transform_0(%arg0: i32, %arg1: i32) -> (i32, i32) {
    %c1_i32 = arith.constant 1 : i32
    %0 = arith.muli %arg0, %c1_i32 : i32
    %1 = arith.addi %0, %arg1 : i32
    %c0_i32 = arith.constant 0 : i32
    %c0_i32_0 = arith.constant 0 : i32
    return %1, %c0_i32 : i32, i32
  }
  func.func @transform_1(%arg0: i32, %arg1: i32) -> (i32, i32) {
    %c0_i32 = arith.constant 0 : i32
    %c0_i32_0 = arith.constant 0 : i32
    %c0_i32_1 = arith.constant 0 : i32
    return %c0_i32, %c0_i32_0 : i32, i32
  }
  func.func @transform_2(%arg0: i32, %arg1: i32) -> (i32, i32) {
    %c0_i32 = arith.constant 0 : i32
    %c0_i32_0 = arith.constant 0 : i32
    %c0_i32_1 = arith.constant 0 : i32
    return %c0_i32, %c0_i32_0 : i32, i32
  }
  func.func @transform_3(%arg0: i32, %arg1: i32) -> (i32, i32) {
    %c0_i32 = arith.constant 0 : i32
    %c0_i32_0 = arith.constant 0 : i32
    return %arg0, %c0_i32 : i32, i32
  }
}

</mosaic_0001>

<llo_original>
// kernel: tpu_custom_call.1
$region0: #{tpu_custom_call.1}
  #allocation0 [shape = 'u32[]', space=smem, size = 0x4, offset = 0x4, fixed_abs, tag = 'smem constant byte address 0x4 - core index']
  #allocation1 [shape = 'u32[144,128]{1,0:T(1,128)}', space=vmem, size = 0x12000, scoped, tag = 'internal scratch']
  #allocation2 [shape = 'f32[8,128]{1,0:T(8,128)}', space=vmem, size = 0x1000, scoped, tag = 'scratch operand']
  #allocation3 [shape = 'f32[8,128]{1,0:T(8,128)}', space=vmem, size = 0x1000, scoped, tag = 'scratch operand']
  #allocation4 [shape = 'f32[64,512]{1,0:T(8,128)}', space=vmem, size = 0x20000, scoped, tag = 'scratch operand']
  %s0 = inlined_call_operand.vmem [shape: s32[64,1], index: 0, kind: input, shape index: {}]
  %s1 = inlined_call_operand.hbm [shape: bf16[256,512], index: 1, kind: input, shape index: {}]
  %s2 = inlined_call_operand.hbm [shape: bf16[128,512], index: 2, kind: input, shape index: {}]
  %s3 = inlined_call_operand.hbm [shape: f32[8,128], index: 3, kind: output, shape index: {}]
  %s4 = sld [smem:[#allocation0]]
  $region45: #{tpu_custom_call.1} parent=0
    _
  %s6 = ssub.s32 1, %s4
  %s7 = scalar_select 0, %s6, %s4
  $region1: #{tpu_custom_call.1} parent=0
    #allocation5 [shape = 'u8[262144]{0}', space=vmem, size = 0x40000, scoped, tag = 'input window, operand 1, single buffered']
    #allocation6 [shape = 's32[1]{0}', space=sflag, size = 0x4, scoped, tag = 'scoped memory for tpu_custom_call.1']
    #allocation7 [shape = 's32[1]{0}', space=sflag, size = 0x4, scoped, tag = 'scoped memory for tpu_custom_call.1']
    #allocation8 [shape = 'u8[131072]{0}', space=vmem, size = 0x20000, scoped, tag = 'input window, operand 2, single buffered']
    #allocation9 [shape = 's32[1]{0}', space=sflag, size = 0x4, scoped, tag = 'scoped memory for tpu_custom_call.1']
    #allocation10 [shape = 'u8[4096]{0}', space=vmem, size = 0x1000, scoped, tag = 'output window, operand 0, single buffered']
    %8 = vsyncpa [#allocation6], 0
    %9 = vsyncpa [#allocation9], 0
    %10 = vsyncpa [#allocation7], 0
    // Predicated region
    $region2: #{tpu_custom_call.1} parent=1 // pred_check
      _
    $region3: #{tpu_custom_call.1} parent=1 // pred_check_branch
      %12 = sbr.rel (0) target = $region5
    $region4: #{tpu_custom_call.1} parent=1 // pred_region
      %s13 = sadd.s32 0, 0
      %s14 = smul.u32 8, %s13
      %p15 = scmp.lt.s32.totalorder %s14, 7
      %s16 = scalar_select %p15, %s14, 7
      %s17 = smul.addr %s16, 8
      %s18 = scalar_lea.vmem %s0, %s17
      %s19 = sadd.s32 0, 0
      %s20 = smul.u32 8, %s19
    $region5: #{tpu_custom_call.1} parent=1 // pred_fallthru
      _
    // Predicated region
    $region6: #{tpu_custom_call.1} parent=1 // pred_check
      _
    $region7: #{tpu_custom_call.1} parent=1 // pred_check_branch
      %22 = sbr.rel (0) target = $region9
    $region8: #{tpu_custom_call.1} parent=1 // pred_region
      %s24 = ssub.s32 8192, 8192
      %25 = vsyncadd [#allocation6], %s24
      %s26 = sshll.u32 [#allocation5], 4
      %s27 = int_to_ptr.vmem [resolvable:$true] %s26
      %32 = dma.hbm_to_vmem [thread:$0]  %s1, 8192, %s27, [#allocation6], 256, 256, 16
    $region9: #{tpu_custom_call.1} parent=1 // pred_fallthru
      _
    // Predicated region
    $region10: #{tpu_custom_call.1} parent=1 // pred_check
      _
    $region11: #{tpu_custom_call.1} parent=1 // pred_check_branch
      %34 = sbr.rel (0) target = $region13
    $region12: #{tpu_custom_call.1} parent=1 // pred_region
      %s36 = ssub.s32 4096, 4096
      %37 = vsyncadd [#allocation9], %s36
      %s38 = sshll.u32 [#allocation8], 4
      %s39 = int_to_ptr.vmem [resolvable:$true] %s38
      %44 = dma.hbm_to_vmem [thread:$0]  %s2, 4096, %s39, [#allocation9], 256, 256, 16
    $region13: #{tpu_custom_call.1} parent=1 // pred_fallthru
      _
    // Predicated region
    $region14: #{tpu_custom_call.1} parent=1 // pred_check
      _
    $region15: #{tpu_custom_call.1} parent=1 // pred_check_branch
      %46 = sbr.rel (0) target = $region17
    $region16: #{tpu_custom_call.1} parent=1 // pred_region
      %47 = dma.done [#allocation6], 8192
    $region17: #{tpu_custom_call.1} parent=1 // pred_fallthru
      _
    // Predicated region
    $region18: #{tpu_custom_call.1} parent=1 // pred_check
      _
    $region19: #{tpu_custom_call.1} parent=1 // pred_check_branch
      %49 = sbr.rel (0) target = $region21
    $region20: #{tpu_custom_call.1} parent=1 // pred_region
      %50 = dma.done [#allocation9], 4096
    $region21: #{tpu_custom_call.1} parent=1 // pred_fallthru
      _
    %s51 = sadd.s32 0, 0
    %s52 = smul.u32 8, %s51
    %p53 = scmp.lt.s32.totalorder %s52, 7
    %s54 = scalar_select %p53, %s52, 7
    %s55 = smul.addr %s54, 8
    %s56 = scalar_lea.vmem %s0, %s55
    %s57 = sadd.s32 0, 0
    %s58 = smul.u32 8, %s57
    %p59 = scmp.lt.s32.totalorder %s58, 7
    %s60 = scalar_select %p59, %s58, 7
    %s61 = smul.addr %s60, 8
    %s62 = scalar_lea.vmem %s0, %s61
    %s63 = sadd.s32 0, 0
    %s64 = smul.u32 8, %s63
    %p66 = scmp.eq.s32.totalorder 0, 0
    // Predicated region
    $region22: #{tpu_custom_call.1} parent=1 // pred_check
      %p67 = pneg %p66
    $region23: #{tpu_custom_call.1} parent=1 // pred_check_branch
      %69 = sbr.rel (%p67) target = $region25
    $region24: #{tpu_custom_call.1} parent=1 // pred_region
      %70 = vst [vmem:[#allocation2] sm:$0xff] 0.0
      %71 = vst [vmem:[#allocation3] sm:$0xff] 0.0
    $region25: #{tpu_custom_call.1} parent=1 // pred_fallthru
      _
    %v72 = vld [vmem:[%s62] sm:$0xff]
    %v73 = vld [vmem:[%s62 + $0x8] sm:$0xff]
    %v74 = vld [vmem:[%s62 + $0x10] sm:$0xff]
    %v75 = vld [vmem:[%s62 + $0x18] sm:$0xff]
    %v76 = vld [vmem:[%s62 + $0x20] sm:$0xff]
    %v77 = vld [vmem:[%s62 + $0x28] sm:$0xff]
    %v78 = vld [vmem:[%s62 + $0x30] sm:$0xff]
    %v79 = vld [vmem:[%s62 + $0x38] sm:$0xff]
    %v80 = vlaneseq
    %v81 = vand.u32 %v80, 127
    %v82 = vadd.s32 %v81, 128
    %83 = vset.pattern.permute.xlu0 0
    %84 = vperm.xlu0 %83, %v72
    %v85 = vpop.permute.xlu0 %84
    %86 = vset.pattern.permute.xlu0 0
    %87 = vperm.xlu0 %86, %v73
    %v88 = vpop.permute.xlu0 %87
    %89 = vset.pattern.permute.xlu0 0
    %90 = vperm.xlu0 %89, %v74
    %v91 = vpop.permute.xlu0 %90
    %92 = vset.pattern.permute.xlu0 0
    %93 = vperm.xlu0 %92, %v75
    %v94 = vpop.permute.xlu0 %93
    %95 = vset.pattern.permute.xlu0 0
    %96 = vperm.xlu0 %95, %v76
    %v97 = vpop.permute.xlu0 %96
    %98 = vset.pattern.permute.xlu0 0
    %99 = vperm.xlu0 %98, %v77
    %v100 = vpop.permute.xlu0 %99
    %101 = vset.pattern.permute.xlu0 0
    %102 = vperm.xlu0 %101, %v78
    %v103 = vpop.permute.xlu0 %102
    %104 = vset.pattern.permute.xlu0 0
    %105 = vperm.xlu0 %104, %v79
    %v106 = vpop.permute.xlu0 %105
    %vm107 = vcmp.eq.s32.totalorder %v81, %v85
    %vm108 = vcmp.eq.s32.totalorder %v82, %v85
    %vm109 = vcmp.eq.s32.totalorder %v81, %v88
    %vm110 = vcmp.eq.s32.totalorder %v82, %v88
    %vm111 = vcmp.eq.s32.totalorder %v81, %v91
    %vm112 = vcmp.eq.s32.totalorder %v82, %v91
    %vm113 = vcmp.eq.s32.totalorder %v81, %v94
    %vm114 = vcmp.eq.s32.totalorder %v82, %v94
    %vm115 = vcmp.eq.s32.totalorder %v81, %v97
    %vm116 = vcmp.eq.s32.totalorder %v82, %v97
    %vm117 = vcmp.eq.s32.totalorder %v81, %v100
    %vm118 = vcmp.eq.s32.totalorder %v82, %v100
    %vm119 = vcmp.eq.s32.totalorder %v81, %v103
    %vm120 = vcmp.eq.s32.totalorder %v82, %v103
    %vm121 = vcmp.eq.s32.totalorder %v81, %v106
    %vm122 = vcmp.eq.s32.totalorder %v82, %v106
    %v123 = vsel %vm107, 1, 0
    %v124 = vsel %vm108, 1, 0
    %v125 = vsel %vm109, 1, 0
    %v126 = vsel %vm110, 1, 0
    %v127 = vsel %vm111, 1, 0
    %v128 = vsel %vm112, 1, 0
    %v129 = vsel %vm113, 1, 0
    %v130 = vsel %vm114, 1, 0
    %v131 = vsel %vm115, 1, 0
    %v132 = vsel %vm116, 1, 0
    %v133 = vsel %vm117, 1, 0
    %v134 = vsel %vm118, 1, 0
    %v135 = vsel %vm119, 1, 0
    %v136 = vsel %vm120, 1, 0
    %v137 = vsel %vm121, 1, 0
    %v138 = vsel %vm122, 1, 0
    %v139 = vcvt.s32.f32 %v123
    %v140 = vcvt.s32.f32 %v124
    %v141 = vcvt.s32.f32 %v125
    %v142 = vcvt.s32.f32 %v126
    %v143 = vcvt.s32.f32 %v127
    %v144 = vcvt.s32.f32 %v128
    %v145 = vcvt.s32.f32 %v129
    %v146 = vcvt.s32.f32 %v130
    %v147 = vcvt.s32.f32 %v131
    %v148 = vcvt.s32.f32 %v132
    %v149 = vcvt.s32.f32 %v133
    %v150 = vcvt.s32.f32 %v134
    %v151 = vcvt.s32.f32 %v135
    %v152 = vcvt.s32.f32 %v136
    %v153 = vcvt.s32.f32 %v137
    %v154 = vcvt.s32.f32 %v138
    %v155 = vpack.c.bf16 %v141, %v139
    %v156 = vpack.c.bf16 %v142, %v140
    %v157 = vpack.c.bf16 %v145, %v143
    %v158 = vpack.c.bf16 %v146, %v144
    %v159 = vpack.c.bf16 %v149, %v147
    %v160 = vpack.c.bf16 %v150, %v148
    %v161 = vpack.c.bf16 %v153, %v151
    %v162 = vpack.c.bf16 %v154, %v152
    %v163 = vld [vmem:[#allocation5] sm:$0xff]
    %v164 = vld [vmem:[#allocation5 + $0x8] sm:$0xff]
    %v165 = vld [vmem:[#allocation5 + $0x10] sm:$0xff]
    %v166 = vld [vmem:[#allocation5 + $0x18] sm:$0xff]
    %v167 = vld [vmem:[#allocation5 + $0x20] sm:$0xff]
    %v168 = vld [vmem:[#allocation5 + $0x28] sm:$0xff]
    %v169 = vld [vmem:[#allocation5 + $0x30] sm:$0xff]
    %v170 = vld [vmem:[#allocation5 + $0x38] sm:$0xff]
    %v171 = vld [vmem:[#allocation5 + $0x40] sm:$0xff]
    %v172 = vld [vmem:[#allocation5 + $0x48] sm:$0xff]
    %v173 = vld [vmem:[#allocation5 + $0x50] sm:$0xff]
    %v174 = vld [vmem:[#allocation5 + $0x58] sm:$0xff]
    %v175 = vld [vmem:[#allocation5 + $0x60] sm:$0xff]
    %v176 = vld [vmem:[#allocation5 + $0x68] sm:$0xff]
    %v177 = vld [vmem:[#allocation5 + $0x70] sm:$0xff]
    %v178 = vld [vmem:[#allocation5 + $0x78] sm:$0xff]
    %v179 = vld [vmem:[#allocation5 + $0x80] sm:$0xff]
    %v180 = vld [vmem:[#allocation5 + $0x88] sm:$0xff]
    %v181 = vld [vmem:[#allocation5 + $0x90] sm:$0xff]
    %v182 = vld [vmem:[#allocation5 + $0x98] sm:$0xff]
    %v183 = vld [vmem:[#allocation5 + $0xa0] sm:$0xff]
    %v184 = vld [vmem:[#allocation5 + $0xa8] sm:$0xff]
    %v185 = vld [vmem:[#allocation5 + $0xb0] sm:$0xff]
    %v186 = vld [vmem:[#allocation5 + $0xb8] sm:$0xff]
    %v187 = vld [vmem:[#allocation5 + $0xc0] sm:$0xff]
    %v188 = vld [vmem:[#allocation5 + $0xc8] sm:$0xff]
    %v189 = vld [vmem:[#allocation5 + $0xd0] sm:$0xff]
    %v190 = vld [vmem:[#allocation5 + $0xd8] sm:$0xff]
    %v191 = vld [vmem:[#allocation5 + $0xe0] sm:$0xff]
    %v192 = vld [vmem:[#allocation5 + $0xe8] sm:$0xff]
    %v193 = vld [vmem:[#allocation5 + $0xf0] sm:$0xff]
    %v194 = vld [vmem:[#allocation5 + $0xf8] sm:$0xff]
    %v195 = vld [vmem:[#allocation5 + $0x100] sm:$0xff]
    %v196 = vld [vmem:[#allocation5 + $0x108] sm:$0xff]
    %v197 = vld [vmem:[#allocation5 + $0x110] sm:$0xff]
    %v198 = vld [vmem:[#allocation5 + $0x118] sm:$0xff]
    %v199 = vld [vmem:[#allocation5 + $0x120] sm:$0xff]
    %v200 = vld [vmem:[#allocation5 + $0x128] sm:$0xff]
    %v201 = vld [vmem:[#allocation5 + $0x130] sm:$0xff]
    %v202 = vld [vmem:[#allocation5 + $0x138] sm:$0xff]
    %v203 = vld [vmem:[#allocation5 + $0x140] sm:$0xff]
    %v204 = vld [vmem:[#allocation5 + $0x148] sm:$0xff]
    %v205 = vld [vmem:[#allocation5 + $0x150] sm:$0xff]
    %v206 = vld [vmem:[#allocation5 + $0x158] sm:$0xff]
    %v207 = vld [vmem:[#allocation5 + $0x160] sm:$0xff]
    %v208 = vld [vmem:[#allocation5 + $0x168] sm:$0xff]
    %v209 = vld [vmem:[#allocation5 + $0x170] sm:$0xff]
    %v210 = vld [vmem:[#allocation5 + $0x178] sm:$0xff]
    %v211 = vld [vmem:[#allocation5 + $0x180] sm:$0xff]
    %v212 = vld [vmem:[#allocation5 + $0x188] sm:$0xff]
    %v213 = vld [vmem:[#allocation5 + $0x190] sm:$0xff]
    %v214 = vld [vmem:[#allocation5 + $0x198] sm:$0xff]
    %v215 = vld [vmem:[#allocation5 + $0x1a0] sm:$0xff]
    %v216 = vld [vmem:[#allocation5 + $0x1a8] sm:$0xff]
    %v217 = vld [vmem:[#allocation5 + $0x1b0] sm:$0xff]
    %v218 = vld [vmem:[#allocation5 + $0x1b8] sm:$0xff]
    %v219 = vld [vmem:[#allocation5 + $0x1c0] sm:$0xff]
    %v220 = vld [vmem:[#allocation5 + $0x1c8] sm:$0xff]
    %v221 = vld [vmem:[#allocation5 + $0x1d0] sm:$0xff]
    %v222 = vld [vmem:[#allocation5 + $0x1d8] sm:$0xff]
    %v223 = vld [vmem:[#allocation5 + $0x1e0] sm:$0xff]
    %v224 = vld [vmem:[#allocation5 + $0x1e8] sm:$0xff]
    %v225 = vld [vmem:[#allocation5 + $0x1f0] sm:$0xff]
    %v226 = vld [vmem:[#allocation5 + $0x1f8] sm:$0xff]
    %v291 = vunpack.c.l.b16 %v163
    %v292 = vunpack.c.h.b16 %v163
    %v293 = vunpack.c.l.b16 %v164
    %v294 = vunpack.c.h.b16 %v164
    %v295 = vunpack.c.l.b16 %v165
    %v296 = vunpack.c.h.b16 %v165
    %v297 = vunpack.c.l.b16 %v166
    %v298 = vunpack.c.h.b16 %v166
    %v299 = vunpack.c.l.b16 %v167
    %v300 = vunpack.c.h.b16 %v167
    %v301 = vunpack.c.l.b16 %v168
    %v302 = vunpack.c.h.b16 %v168
    %v303 = vunpack.c.l.b16 %v169
    %v304 = vunpack.c.h.b16 %v169
    %v305 = vunpack.c.l.b16 %v170
    %v306 = vunpack.c.h.b16 %v170
    %v307 = vunpack.c.l.b16 %v171
    %v308 = vunpack.c.h.b16 %v171
    %v309 = vunpack.c.l.b16 %v172
    %v310 = vunpack.c.h.b16 %v172
    %v311 = vunpack.c.l.b16 %v173
    %v312 = vunpack.c.h.b16 %v173
    %v313 = vunpack.c.l.b16 %v174
    %v314 = vunpack.c.h.b16 %v174
    %v315 = vunpack.c.l.b16 %v175
    %v316 = vunpack.c.h.b16 %v175
    %v317 = vunpack.c.l.b16 %v176
    %v318 = vunpack.c.h.b16 %v176
    %v319 = vunpack.c.l.b16 %v177
    %v320 = vunpack.c.h.b16 %v177
    %v321 = vunpack.c.l.b16 %v178
    %v322 = vunpack.c.h.b16 %v178
    %v323 = vunpack.c.l.b16 %v179
    %v324 = vunpack.c.h.b16 %v179
    %v325 = vunpack.c.l.b16 %v180
    %v326 = vunpack.c.h.b16 %v180
    %v327 = vunpack.c.l.b16 %v181
    %v328 = vunpack.c.h.b16 %v181
    %v329 = vunpack.c.l.b16 %v182
    %v330 = vunpack.c.h.b16 %v182
    %v331 = vunpack.c.l.b16 %v183
    %v332 = vunpack.c.h.b16 %v183
    %v333 = vunpack.c.l.b16 %v184
    %v334 = vunpack.c.h.b16 %v184
    %v335 = vunpack.c.l.b16 %v185
    %v336 = vunpack.c.h.b16 %v185
    %v337 = vunpack.c.l.b16 %v186
    %v338 = vunpack.c.h.b16 %v186
    %v339 = vunpack.c.l.b16 %v187
    %v340 = vunpack.c.h.b16 %v187
    %v341 = vunpack.c.l.b16 %v188
    %v342 = vunpack.c.h.b16 %v188
    %v343 = vunpack.c.l.b16 %v189
    %v344 = vunpack.c.h.b16 %v189
    %v345 = vunpack.c.l.b16 %v190
    %v346 = vunpack.c.h.b16 %v190
    %v347 = vunpack.c.l.b16 %v191
    %v348 = vunpack.c.h.b16 %v191
    %v349 = vunpack.c.l.b16 %v192
    %v350 = vunpack.c.h.b16 %v192
    %v351 = vunpack.c.l.b16 %v193
    %v352 = vunpack.c.h.b16 %v193
    %v353 = vunpack.c.l.b16 %v194
    %v354 = vunpack.c.h.b16 %v194
    %v355 = vunpack.c.l.b16 %v195
    %v356 = vunpack.c.h.b16 %v195
    %v357 = vunpack.c.l.b16 %v196
    %v358 = vunpack.c.h.b16 %v196
    %v359 = vunpack.c.l.b16 %v197
    %v360 = vunpack.c.h.b16 %v197
    %v361 = vunpack.c.l.b16 %v198
    %v362 = vunpack.c.h.b16 %v198
    %v363 = vunpack.c.l.b16 %v199
    %v364 = vunpack.c.h.b16 %v199
    %v365 = vunpack.c.l.b16 %v200
    %v366 = vunpack.c.h.b16 %v200
    %v367 = vunpack.c.l.b16 %v201
    %v368 = vunpack.c.h.b16 %v201
    %v369 = vunpack.c.l.b16 %v202
    %v370 = vunpack.c.h.b16 %v202
    %v371 = vunpack.c.l.b16 %v203
    %v372 = vunpack.c.h.b16 %v203
    %v373 = vunpack.c.l.b16 %v204
    %v374 = vunpack.c.h.b16 %v204
    %v375 = vunpack.c.l.b16 %v205
    %v376 = vunpack.c.h.b16 %v205
    %v377 = vunpack.c.l.b16 %v206
    %v378 = vunpack.c.h.b16 %v206
    %v379 = vunpack.c.l.b16 %v207
    %v380 = vunpack.c.h.b16 %v207
    %v381 = vunpack.c.l.b16 %v208
    %v382 = vunpack.c.h.b16 %v208
    %v383 = vunpack.c.l.b16 %v209
    %v384 = vunpack.c.h.b16 %v209
    %v385 = vunpack.c.l.b16 %v210
    %v386 = vunpack.c.h.b16 %v210
    %v387 = vunpack.c.l.b16 %v211
    %v388 = vunpack.c.h.b16 %v211
    %v389 = vunpack.c.l.b16 %v212
    %v390 = vunpack.c.h.b16 %v212
    %v391 = vunpack.c.l.b16 %v213
    %v392 = vunpack.c.h.b16 %v213
    %v393 = vunpack.c.l.b16 %v214
    %v394 = vunpack.c.h.b16 %v214
    %v395 = vunpack.c.l.b16 %v215
    %v396 = vunpack.c.h.b16 %v215
    %v397 = vunpack.c.l.b16 %v216
    %v398 = vunpack.c.h.b16 %v216
    %v399 = vunpack.c.l.b16 %v217
    %v400 = vunpack.c.h.b16 %v217
    %v401 = vunpack.c.l.b16 %v218
    %v402 = vunpack.c.h.b16 %v218
    %v403 = vunpack.c.l.b16 %v219
    %v404 = vunpack.c.h.b16 %v219
    %v405 = vunpack.c.l.b16 %v220
    %v406 = vunpack.c.h.b16 %v220
    %v407 = vunpack.c.l.b16 %v221
    %v408 = vunpack.c.h.b16 %v221
    %v409 = vunpack.c.l.b16 %v222
    %v410 = vunpack.c.h.b16 %v222
    %v411 = vunpack.c.l.b16 %v223
    %v412 = vunpack.c.h.b16 %v223
    %v413 = vunpack.c.l.b16 %v224
    %v414 = vunpack.c.h.b16 %v224
    %v415 = vunpack.c.l.b16 %v225
    %v416 = vunpack.c.h.b16 %v225
    %v417 = vunpack.c.l.b16 %v226
    %v418 = vunpack.c.h.b16 %v226
    %v419 = vpack.c.b16 %v295, %v291
    %v420 = vpack.c.b16 %v296, %v292
    %v421 = vpack.c.b16 %v297, %v293
    %v422 = vpack.c.b16 %v298, %v294
    %v423 = vpack.c.b16 %v303, %v299
    %v424 = vpack.c.b16 %v304, %v300
    %v425 = vpack.c.b16 %v305, %v301
    %v426 = vpack.c.b16 %v306, %v302
    %v427 = vpack.c.b16 %v311, %v307
    %v428 = vpack.c.b16 %v312, %v308
    %v429 = vpack.c.b16 %v313, %v309
    %v430 = vpack.c.b16 %v314, %v310
    %v431 = vpack.c.b16 %v319, %v315
    %v432 = vpack.c.b16 %v320, %v316
    %v433 = vpack.c.b16 %v321, %v317
    %v434 = vpack.c.b16 %v322, %v318
    %v435 = vpack.c.b16 %v327, %v323
    %v436 = vpack.c.b16 %v328, %v324
    %v437 = vpack.c.b16 %v329, %v325
    %v438 = vpack.c.b16 %v330, %v326
    %v439 = vpack.c.b16 %v335, %v331
    %v440 = vpack.c.b16 %v336, %v332
    %v441 = vpack.c.b16 %v337, %v333
    %v442 = vpack.c.b16 %v338, %v334
    %v443 = vpack.c.b16 %v343, %v339
    %v444 = vpack.c.b16 %v344, %v340
    %v445 = vpack.c.b16 %v345, %v341
    %v446 = vpack.c.b16 %v346, %v342
    %v447 = vpack.c.b16 %v351, %v347
    %v448 = vpack.c.b16 %v352, %v348
    %v449 = vpack.c.b16 %v353, %v349
    %v450 = vpack.c.b16 %v354, %v350
    %v451 = vpack.c.b16 %v359, %v355
    %v452 = vpack.c.b16 %v360, %v356
    %v453 = vpack.c.b16 %v361, %v357
    %v454 = vpack.c.b16 %v362, %v358
    %v455 = vpack.c.b16 %v367, %v363
    %v456 = vpack.c.b16 %v368, %v364
    %v457 = vpack.c.b16 %v369, %v365
    %v458 = vpack.c.b16 %v370, %v366
    %v459 = vpack.c.b16 %v375, %v371
    %v460 = vpack.c.b16 %v376, %v372
    %v461 = vpack.c.b16 %v377, %v373
    %v462 = vpack.c.b16 %v378, %v374
    %v463 = vpack.c.b16 %v383, %v379
    %v464 = vpack.c.b16 %v384, %v380
    %v465 = vpack.c.b16 %v385, %v381
    %v466 = vpack.c.b16 %v386, %v382
    %v467 = vpack.c.b16 %v391, %v387
    %v468 = vpack.c.b16 %v392, %v388
    %v469 = vpack.c.b16 %v393, %v389
    %v470 = vpack.c.b16 %v394, %v390
    %v471 = vpack.c.b16 %v399, %v395
    %v472 = vpack.c.b16 %v400, %v396
    %v473 = vpack.c.b16 %v401, %v397
    %v474 = vpack.c.b16 %v402, %v398
    %v475 = vpack.c.b16 %v407, %v403
    %v476 = vpack.c.b16 %v408, %v404
    %v477 = vpack.c.b16 %v409, %v405
    %v478 = vpack.c.b16 %v410, %v406
    %v479 = vpack.c.b16 %v415, %v411
    %v480 = vpack.c.b16 %v416, %v412
    %v481 = vpack.c.b16 %v417, %v413
    %v482 = vpack.c.b16 %v418, %v414
    %547 = vmatprep.subr.bf16.mxu0 %v420
    %548 = vmatpush1.bf16.msra.mxu0 %v419
    %549 = vmatprep.subr.bf16.mxu0 %v424
    %550 = vmatpush1.bf16.msra.mxu0 %v423
    %551 = vmatprep.subr.bf16.mxu0 %v428
    %552 = vmatpush1.bf16.msra.mxu0 %v427
    %553 = vmatprep.subr.bf16.mxu0 %v432
    %554 = vmatpush1.bf16.msra.mxu0 %v431
    %555 = vmatprep.subr.bf16.mxu0 %v436
    %556 = vmatpush1.bf16.msra.mxu0 %v435
    %557 = vmatprep.subr.bf16.mxu0 %v440
    %558 = vmatpush1.bf16.msra.mxu0 %v439
    %559 = vmatprep.subr.bf16.mxu0 %v444
    %560 = vmatpush1.bf16.msra.mxu0 %v443
    %561 = vmatprep.subr.bf16.mxu0 %v448
    %562 = vmatpush1.bf16.msra.mxu0 %v447
    %563 = vmatprep.subr.bf16.mxu0 %v452
    %564 = vmatpush1.bf16.msra.mxu0 %v451
    %565 = vmatprep.subr.bf16.mxu0 %v456
    %566 = vmatpush1.bf16.msra.mxu0 %v455
    %567 = vmatprep.subr.bf16.mxu0 %v460
    %568 = vmatpush1.bf16.msra.mxu0 %v459
    %569 = vmatprep.subr.bf16.mxu0 %v464
    %570 = vmatpush1.bf16.msra.mxu0 %v463
    %571 = vmatprep.subr.bf16.mxu0 %v468
    %572 = vmatpush1.bf16.msra.mxu0 %v467
    %573 = vmatprep.subr.bf16.mxu0 %v472
    %574 = vmatpush1.bf16.msra.mxu0 %v471
    %575 = vmatprep.subr.bf16.mxu0 %v476
    %576 = vmatpush1.bf16.msra.mxu0 %v475
    %577 = vmatprep.subr.bf16.mxu0 %v480
    %578 = vmatpush1.bf16.msra.mxu0 %v479
    %579 = vmatprep.mubr.bf16.mxu0 %v156
    %580 = vmatmul.mubr.bf16.gmra.mrb[0].mxu0 %v155
    %v581 = vpop.f32.mrb[0].mxu0
    %v582 = vadd.f32 0.0, %v581
    %v583 = vpop.f32.mrb[0].mxu0
    %v584 = vadd.f32 0.0, %v583
    %v585 = vpop.f32.mrb[0].mxu0
    %v586 = vadd.f32 0.0, %v585
    %v587 = vpop.f32.mrb[0].mxu0
    %v588 = vadd.f32 0.0, %v587
    %589 = vmatprep.mubr.bf16.mxu0 %v158
    %590 = vmatmul.mubr.bf16.gmra.mrb[0].mxu0 %v157
    %v591 = vpop.f32.mrb[0].mxu0
    %v592 = vadd.f32 0.0, %v591
    %v593 = vpop.f32.mrb[0].mxu0
    %v594 = vadd.f32 0.0, %v593
    %v595 = vpop.f32.mrb[0].mxu0
    %v596 = vadd.f32 0.0, %v595
    %v597 = vpop.f32.mrb[0].mxu0
    %v598 = vadd.f32 0.0, %v597
    %599 = vmatprep.mubr.bf16.mxu0 %v160
    %600 = vmatmul.mubr.bf16.gmra.mrb[0].mxu0 %v159
    %v601 = vpop.f32.mrb[0].mxu0
    %v602 = vadd.f32 0.0, %v601
    %v603 = vpop.f32.mrb[0].mxu0
    %v604 = vadd.f32 0.0, %v603
    %v605 = vpop.f32.mrb[0].mxu0
    %v606 = vadd.f32 0.0, %v605
    %v607 = vpop.f32.mrb[0].mxu0
    %v608 = vadd.f32 0.0, %v607
    %609 = vmatprep.mubr.bf16.mxu0 %v162
    %610 = vmatmul.mubr.bf16.gmra.mrb[0].mxu0 %v161
    %v611 = vpop.f32.mrb[0].mxu0
    %v612 = vadd.f32 0.0, %v611
    %v613 = vpop.f32.mrb[0].mxu0
    %v614 = vadd.f32 0.0, %v613
    %v615 = vpop.f32.mrb[0].mxu0
    %v616 = vadd.f32 0.0, %v615
    %v617 = vpop.f32.mrb[0].mxu0
    %v618 = vadd.f32 0.0, %v617
    %619 = vdwg.mxu0
    %620 = vmatprep.subr.bf16.mxu0 %v422
    %621 = vmatpush1.bf16.msra.mxu0 %v421
    %622 = vmatprep.subr.bf16.mxu0 %v426
    %623 = vmatpush1.bf16.msra.mxu0 %v425
    %624 = vmatprep.subr.bf16.mxu0 %v430
    %625 = vmatpush1.bf16.msra.mxu0 %v429
    %626 = vmatprep.subr.bf16.mxu0 %v434
    %627 = vmatpush1.bf16.msra.mxu0 %v433
    %628 = vmatprep.subr.bf16.mxu0 %v438
    %629 = vmatpush1.bf16.msra.mxu0 %v437
    %630 = vmatprep.subr.bf16.mxu0 %v442
    %631 = vmatpush1.bf16.msra.mxu0 %v441
    %632 = vmatprep.subr.bf16.mxu0 %v446
    %633 = vmatpush1.bf16.msra.mxu0 %v445
    %634 = vmatprep.subr.bf16.mxu0 %v450
    %635 = vmatpush1.bf16.msra.mxu0 %v449
    %636 = vmatprep.subr.bf16.mxu0 %v454
    %637 = vmatpush1.bf16.msra.mxu0 %v453
    %638 = vmatprep.subr.bf16.mxu0 %v458
    %639 = vmatpush1.bf16.msra.mxu0 %v457
    %640 = vmatprep.subr.bf16.mxu0 %v462
    %641 = vmatpush1.bf16.msra.mxu0 %v461
    %642 = vmatprep.subr.bf16.mxu0 %v466
    %643 = vmatpush1.bf16.msra.mxu0 %v465
    %644 = vmatprep.subr.bf16.mxu0 %v470
    %645 = vmatpush1.bf16.msra.mxu0 %v469
    %646 = vmatprep.subr.bf16.mxu0 %v474
    %647 = vmatpush1.bf16.msra.mxu0 %v473
    %648 = vmatprep.subr.bf16.mxu0 %v478
    %649 = vmatpush1.bf16.msra.mxu0 %v477
    %650 = vmatprep.subr.bf16.mxu0 %v482
    %651 = vmatpush1.bf16.msra.mxu0 %v481
    %652 = vmatprep.mubr.bf16.mxu0 %v156
    %653 = vmatmul.mubr.bf16.gmra.mrb[0].mxu0 %v155
    %v654 = vpop.f32.mrb[0].mxu0
    %v655 = vadd.f32 0.0, %v654
    %v656 = vpop.f32.mrb[0].mxu0
    %v657 = vadd.f32 0.0, %v656
    %v658 = vpop.f32.mrb[0].mxu0
    %v659 = vadd.f32 0.0, %v658
    %v660 = vpop.f32.mrb[0].mxu0
    %v661 = vadd.f32 0.0, %v660
    %662 = vmatprep.mubr.bf16.mxu0 %v158
    %663 = vmatmul.mubr.bf16.gmra.mrb[0].mxu0 %v157
    %v664 = vpop.f32.mrb[0].mxu0
    %v665 = vadd.f32 0.0, %v664
    %v666 = vpop.f32.mrb[0].mxu0
    %v667 = vadd.f32 0.0, %v666
    %v668 = vpop.f32.mrb[0].mxu0
    %v669 = vadd.f32 0.0, %v668
    %v670 = vpop.f32.mrb[0].mxu0
    %v671 = vadd.f32 0.0, %v670
    %672 = vmatprep.mubr.bf16.mxu0 %v160
    %673 = vmatmul.mubr.bf16.gmra.mrb[0].mxu0 %v159
    %v674 = vpop.f32.mrb[0].mxu0
    %v675 = vadd.f32 0.0, %v674
    %v676 = vpop.f32.mrb[0].mxu0
    %v677 = vadd.f32 0.0, %v676
    %v678 = vpop.f32.mrb[0].mxu0
    %v679 = vadd.f32 0.0, %v678
    %v680 = vpop.f32.mrb[0].mxu0
    %v681 = vadd.f32 0.0, %v680
    %682 = vmatprep.mubr.bf16.mxu0 %v162
    %683 = vmatmul.mubr.bf16.gmra.mrb[0].mxu0 %v161
    %v684 = vpop.f32.mrb[0].mxu0
    %v685 = vadd.f32 0.0, %v684
    %v686 = vpop.f32.mrb[0].mxu0
    %v687 = vadd.f32 0.0, %v686
    %v688 = vpop.f32.mrb[0].mxu0
    %v689 = vadd.f32 0.0, %v688
    %v690 = vpop.f32.mrb[0].mxu0
    %v691 = vadd.f32 0.0, %v690
    %692 = vdwg.mxu0
    %693 = vst [vmem:[#allocation4] sm:$0xff] %v582
    %694 = vst [vmem:[#allocation4 + $0x8] sm:$0xff] %v584
    %695 = vst [vmem:[#allocation4 + $0x10] sm:$0xff] %v655
    %696 = vst [vmem:[#allocation4 + $0x18] sm:$0xff] %v657
    %697 = vst [vmem:[#allocation4 + $0x20] sm:$0xff] %v586
    %698 = vst [vmem:[#allocation4 + $0x28] sm:$0xff] %v588
    %699 = vst [vmem:[#allocation4 + $0x30] sm:$0xff] %v659
    %700 = vst [vmem:[#allocation4 + $0x38] sm:$0xff] %v661
    %701 = vst [vmem:[#allocation4 + $0x40] sm:$0xff] %v592
    %702 = vst [vmem:[#allocation4 + $0x48] sm:$0xff] %v594
    %703 = vst [vmem:[#allocation4 + $0x50] sm:$0xff] %v665
    %704 = vst [vmem:[#allocation4 + $0x58] sm:$0xff] %v667
    %705 = vst [vmem:[#allocation4 + $0x60] sm:$0xff] %v596
    %706 = vst [vmem:[#allocation4 + $0x68] sm:$0xff] %v598
    %707 = vst [vmem:[#allocation4 + $0x70] sm:$0xff] %v669
    %708 = vst [vmem:[#allocation4 + $0x78] sm:$0xff] %v671
    %709 = vst [vmem:[#allocation4 + $0x80] sm:$0xff] %v602
    %710 = vst [vmem:[#allocation4 + $0x88] sm:$0xff] %v604
    %711 = vst [vmem:[#allocation4 + $0x90] sm:$0xff] %v675
    %712 = vst [vmem:[#allocation4 + $0x98] sm:$0xff] %v677
    %713 = vst [vmem:[#allocation4 + $0xa0] sm:$0xff] %v606
    %714 = vst [vmem:[#allocation4 + $0xa8] sm:$0xff] %v608
    %715 = vst [vmem:[#allocation4 + $0xb0] sm:$0xff] %v679
    %716 = vst [vmem:[#allocation4 + $0xb8] sm:$0xff] %v681
    %717 = vst [vmem:[#allocation4 + $0xc0] sm:$0xff] %v612
    %718 = vst [vmem:[#allocation4 + $0xc8] sm:$0xff] %v614
    %719 = vst [vmem:[#allocation4 + $0xd0] sm:$0xff] %v685
    %720 = vst [vmem:[#allocation4 + $0xd8] sm:$0xff] %v687
    %721 = vst [vmem:[#allocation4 + $0xe0] sm:$0xff] %v616
    %722 = vst [vmem:[#allocation4 + $0xe8] sm:$0xff] %v618
    %723 = vst [vmem:[#allocation4 + $0xf0] sm:$0xff] %v689
    %724 = vst [vmem:[#allocation4 + $0xf8] sm:$0xff] %v691
    %v725 = vld [vmem:[#allocation8] sm:$0xff]
    %v726 = vld [vmem:[#allocation8 + $0x8] sm:$0xff]
    %v727 = vld [vmem:[#allocation8 + $0x10] sm:$0xff]
    %v728 = vld [vmem:[#allocation8 + $0x18] sm:$0xff]
    %v729 = vld [vmem:[#allocation8 + $0x20] sm:$0xff]
    %v730 = vld [vmem:[#allocation8 + $0x28] sm:$0xff]
    %v731 = vld [vmem:[#allocation8 + $0x30] sm:$0xff]
    %v732 = vld [vmem:[#allocation8 + $0x38] sm:$0xff]
    %v733 = vld [vmem:[#allocation8 + $0x40] sm:$0xff]
    %v734 = vld [vmem:[#allocation8 + $0x48] sm:$0xff]
    %v735 = vld [vmem:[#allocation8 + $0x50] sm:$0xff]
    %v736 = vld [vmem:[#allocation8 + $0x58] sm:$0xff]
    %v737 = vld [vmem:[#allocation8 + $0x60] sm:$0xff]
    %v738 = vld [vmem:[#allocation8 + $0x68] sm:$0xff]
    %v739 = vld [vmem:[#allocation8 + $0x70] sm:$0xff]
    %v740 = vld [vmem:[#allocation8 + $0x78] sm:$0xff]
    %v741 = vld [vmem:[#allocation8 + $0x80] sm:$0xff]
    %v742 = vld [vmem:[#allocation8 + $0x88] sm:$0xff]
    %v743 = vld [vmem:[#allocation8 + $0x90] sm:$0xff]
    %v744 = vld [vmem:[#allocation8 + $0x98] sm:$0xff]
    %v745 = vld [vmem:[#allocation8 + $0xa0] sm:$0xff]
    %v746 = vld [vmem:[#allocation8 + $0xa8] sm:$0xff]
    %v747 = vld [vmem:[#allocation8 + $0xb0] sm:$0xff]
    %v748 = vld [vmem:[#allocation8 + $0xb8] sm:$0xff]
    %v749 = vld [vmem:[#allocation8 + $0xc0] sm:$0xff]
    %v750 = vld [vmem:[#allocation8 + $0xc8] sm:$0xff]
    %v751 = vld [vmem:[#allocation8 + $0xd0] sm:$0xff]
    %v752 = vld [vmem:[#allocation8 + $0xd8] sm:$0xff]
    %v753 = vld [vmem:[#allocation8 + $0xe0] sm:$0xff]
    %v754 = vld [vmem:[#allocation8 + $0xe8] sm:$0xff]
    %v755 = vld [vmem:[#allocation8 + $0xf0] sm:$0xff]
    %v756 = vld [vmem:[#allocation8 + $0xf8] sm:$0xff]
    %v757 = vld [vmem:[#allocation2] sm:$0xff]
    %v758 = vld [vmem:[#allocation3] sm:$0xff]
    loop: start=0, step=1, limit=8
    $region26: #{tpu_custom_call.1} parent=1 // loop_pre_header
      _
    $region27: #{tpu_custom_call.1} parent=1 // loop_header
      %s760 = sphi 0, %s764
      %p761 = scmp.ge.s32.totalorder %s760, 8
      %v765 = vphi %v757, %v1047
      %v766 = vphi %v758, %v1045
    $region28: #{tpu_custom_call.1} parent=1 // loop_header_branch
      %763 = sbr.rel (%p761) target = $region32
    $region29: #{tpu_custom_call.1} parent=1 // loop_body
      %s767 = smul.u32 %s760, 8
      %s768 = sshra.s32 %s767, 3
      %s769 = sand.u32 %s767, 7
      %s770 = smul.u32 %s768, 4
      %s771 = smul.addr %s770, 8
      %s772 = scalar_lea.vmem [#allocation4], %s771
      %v773 = vld [vmem:[%s772] sm:$0xff]
      %v774 = vld [vmem:[%s772 + $0x8] sm:$0xff]
      %v775 = vld [vmem:[%s772 + $0x10] sm:$0xff]
      %v776 = vld [vmem:[%s772 + $0x18] sm:$0xff]
      %v777 = vpack.c.bf16 %v765, %v765
      %v810 = vunpack.c.l.b16 %v725
      %v811 = vunpack.c.h.b16 %v725
      %v812 = vunpack.c.l.b16 %v726
      %v813 = vunpack.c.h.b16 %v726
      %v814 = vunpack.c.l.b16 %v727
      %v815 = vunpack.c.h.b16 %v727
      %v816 = vunpack.c.l.b16 %v728
      %v817 = vunpack.c.h.b16 %v728
      %v818 = vunpack.c.l.b16 %v729
      %v819 = vunpack.c.h.b16 %v729
      %v820 = vunpack.c.l.b16 %v730
      %v821 = vunpack.c.h.b16 %v730
      %v822 = vunpack.c.l.b16 %v731
      %v823 = vunpack.c.h.b16 %v731
      %v824 = vunpack.c.l.b16 %v732
      %v825 = vunpack.c.h.b16 %v732
      %v826 = vunpack.c.l.b16 %v733
      %v827 = vunpack.c.h.b16 %v733
      %v828 = vunpack.c.l.b16 %v734
      %v829 = vunpack.c.h.b16 %v734
      %v830 = vunpack.c.l.b16 %v735
      %v831 = vunpack.c.h.b16 %v735
      %v832 = vunpack.c.l.b16 %v736
      %v833 = vunpack.c.h.b16 %v736
      %v834 = vunpack.c.l.b16 %v737
      %v835 = vunpack.c.h.b16 %v737
      %v836 = vunpack.c.l.b16 %v738
      %v837 = vunpack.c.h.b16 %v738
      %v838 = vunpack.c.l.b16 %v739
      %v839 = vunpack.c.h.b16 %v739
      %v840 = vunpack.c.l.b16 %v740
      %v841 = vunpack.c.h.b16 %v740
      %v842 = vunpack.c.l.b16 %v741
      %v843 = vunpack.c.h.b16 %v741
      %v844 = vunpack.c.l.b16 %v742
      %v845 = vunpack.c.h.b16 %v742
      %v846 = vunpack.c.l.b16 %v743
      %v847 = vunpack.c.h.b16 %v743
      %v848 = vunpack.c.l.b16 %v744
      %v849 = vunpack.c.h.b16 %v744
      %v850 = vunpack.c.l.b16 %v745
      %v851 = vunpack.c.h.b16 %v745
      %v852 = vunpack.c.l.b16 %v746
      %v853 = vunpack.c.h.b16 %v746
      %v854 = vunpack.c.l.b16 %v747
      %v855 = vunpack.c.h.b16 %v747
      %v856 = vunpack.c.l.b16 %v748
      %v857 = vunpack.c.h.b16 %v748
      %v858 = vunpack.c.l.b16 %v749
      %v859 = vunpack.c.h.b16 %v749
      %v860 = vunpack.c.l.b16 %v750
      %v861 = vunpack.c.h.b16 %v750
      %v862 = vunpack.c.l.b16 %v751
      %v863 = vunpack.c.h.b16 %v751
      %v864 = vunpack.c.l.b16 %v752
      %v865 = vunpack.c.h.b16 %v752
      %v866 = vunpack.c.l.b16 %v753
      %v867 = vunpack.c.h.b16 %v753
      %v868 = vunpack.c.l.b16 %v754
      %v869 = vunpack.c.h.b16 %v754
      %v870 = vunpack.c.l.b16 %v755
      %v871 = vunpack.c.h.b16 %v755
      %v872 = vunpack.c.l.b16 %v756
      %v873 = vunpack.c.h.b16 %v756
      %v874 = vpack.c.b16 %v814, %v810
      %v875 = vpack.c.b16 %v815, %v811
      %v876 = vpack.c.b16 %v816, %v812
      %v877 = vpack.c.b16 %v817, %v813
      %v878 = vpack.c.b16 %v822, %v818
      %v879 = vpack.c.b16 %v823, %v819
      %v880 = vpack.c.b16 %v824, %v820
      %v881 = vpack.c.b16 %v825, %v821
      %v882 = vpack.c.b16 %v830, %v826
      %v883 = vpack.c.b16 %v831, %v827
      %v884 = vpack.c.b16 %v832, %v828
      %v885 = vpack.c.b16 %v833, %v829
      %v886 = vpack.c.b16 %v838, %v834
      %v887 = vpack.c.b16 %v839, %v835
      %v888 = vpack.c.b16 %v840, %v836
      %v889 = vpack.c.b16 %v841, %v837
      %v890 = vpack.c.b16 %v846, %v842
      %v891 = vpack.c.b16 %v847, %v843
      %v892 = vpack.c.b16 %v848, %v844
      %v893 = vpack.c.b16 %v849, %v845
      %v894 = vpack.c.b16 %v854, %v850
      %v895 = vpack.c.b16 %v855, %v851
      %v896 = vpack.c.b16 %v856, %v852
      %v897 = vpack.c.b16 %v857, %v853
      %v898 = vpack.c.b16 %v862, %v858
      %v899 = vpack.c.b16 %v863, %v859
      %v900 = vpack.c.b16 %v864, %v860
      %v901 = vpack.c.b16 %v865, %v861
      %v902 = vpack.c.b16 %v870, %v866
      %v903 = vpack.c.b16 %v871, %v867
      %v904 = vpack.c.b16 %v872, %v868
      %v905 = vpack.c.b16 %v873, %v869
      %938 = vmatprep.subr.bf16.mxu0 %v875
      %939 = vmatpush1.bf16.msra.mxu0 %v874
      %940 = vmatprep.subr.bf16.mxu0 %v879
      %941 = vmatpush1.bf16.msra.mxu0 %v878
      %942 = vmatprep.subr.bf16.mxu0 %v883
      %943 = vmatpush1.bf16.msra.mxu0 %v882
      %944 = vmatprep.subr.bf16.mxu0 %v887
      %945 = vmatpush1.bf16.msra.mxu0 %v886
      %946 = vmatprep.subr.bf16.mxu0 %v891
      %947 = vmatpush1.bf16.msra.mxu0 %v890
      %948 = vmatprep.subr.bf16.mxu0 %v895
      %949 = vmatpush1.bf16.msra.mxu0 %v894
      %950 = vmatprep.subr.bf16.mxu0 %v899
      %951 = vmatpush1.bf16.msra.mxu0 %v898
      %952 = vmatprep.subr.bf16.mxu0 %v903
      %953 = vmatpush1.bf16.msra.mxu0 %v902
      %954 = vmatprep.subr.bf16.mxu0 0
      %955 = vmatpush1.bf16.msra.mxu0 0
      %956 = vmatprep.subr.bf16.mxu0 0
      %957 = vmatpush1.bf16.msra.mxu0 0
      %958 = vmatprep.subr.bf16.mxu0 0
      %959 = vmatpush1.bf16.msra.mxu0 0
      %960 = vmatprep.subr.bf16.mxu0 0
      %961 = vmatpush1.bf16.msra.mxu0 0
      %962 = vmatprep.subr.bf16.mxu0 0
      %963 = vmatpush1.bf16.msra.mxu0 0
      %964 = vmatprep.subr.bf16.mxu0 0
      %965 = vmatpush1.bf16.msra.mxu0 0
      %966 = vmatprep.subr.bf16.mxu0 0
      %967 = vmatpush1.bf16.msra.mxu0 0
      %968 = vmatprep.subr.bf16.mxu0 0
      %969 = vmatpush1.bf16.msra.mxu0 0
      %970 = vmatprep.mubr.bf16.mxu0 0
      %971 = vmatmul.mubr.bf16.gmra.mrb[0].mxu0 %v777
      %v972 = vpop.f32.mrb[0].mxu0
      %v973 = vadd.f32 0.0, %v972
      %v974 = vpop.f32.mrb[0].mxu0
      %v975 = vadd.f32 0.0, %v974
      %v976 = vpop.f32.mrb[0].mxu0
      %v977 = vpop.f32.mrb[0].mxu0
      %978 = vdwg.mxu0
      %979 = vmatprep.subr.bf16.mxu0 %v877
      %980 = vmatpush1.bf16.msra.mxu0 %v876
      %981 = vmatprep.subr.bf16.mxu0 %v881
      %982 = vmatpush1.bf16.msra.mxu0 %v880
      %983 = vmatprep.subr.bf16.mxu0 %v885
      %984 = vmatpush1.bf16.msra.mxu0 %v884
      %985 = vmatprep.subr.bf16.mxu0 %v889
      %986 = vmatpush1.bf16.msra.mxu0 %v888
      %987 = vmatprep.subr.bf16.mxu0 %v893
      %988 = vmatpush1.bf16.msra.mxu0 %v892
      %989 = vmatprep.subr.bf16.mxu0 %v897
      %990 = vmatpush1.bf16.msra.mxu0 %v896
      %991 = vmatprep.subr.bf16.mxu0 %v901
      %992 = vmatpush1.bf16.msra.mxu0 %v900
      %993 = vmatprep.subr.bf16.mxu0 %v905
      %994 = vmatpush1.bf16.msra.mxu0 %v904
      %995 = vmatprep.subr.bf16.mxu0 0
      %996 = vmatpush1.bf16.msra.mxu0 0
      %997 = vmatprep.subr.bf16.mxu0 0
      %998 = vmatpush1.bf16.msra.mxu0 0
      %999 = vmatprep.subr.bf16.mxu0 0
      %1000 = vmatpush1.bf16.msra.mxu0 0
      %1001 = vmatprep.subr.bf16.mxu0 0
      %1002 = vmatpush1.bf16.msra.mxu0 0
      %1003 = vmatprep.subr.bf16.mxu0 0
      %1004 = vmatpush1.bf16.msra.mxu0 0
      %1005 = vmatprep.subr.bf16.mxu0 0
      %1006 = vmatpush1.bf16.msra.mxu0 0
      %1007 = vmatprep.subr.bf16.mxu0 0
      %1008 = vmatpush1.bf16.msra.mxu0 0
      %1009 = vmatprep.subr.bf16.mxu0 0
      %1010 = vmatpush1.bf16.msra.mxu0 0
      %1011 = vmatprep.mubr.bf16.mxu0 0
      %1012 = vmatmul.mubr.bf16.gmra.mrb[0].mxu0 %v777
      %v1013 = vpop.f32.mrb[0].mxu0
      %v1014 = vadd.f32 0.0, %v1013
      %v1015 = vpop.f32.mrb[0].mxu0
      %v1016 = vadd.f32 0.0, %v1015
      %v1017 = vpop.f32.mrb[0].mxu0
      %v1018 = vpop.f32.mrb[0].mxu0
      %1019 = vdwg.mxu0
      %v1020 = vadd.f32 %v773, %v973
      %v1021 = vadd.f32 %v774, %v975
      %v1022 = vadd.f32 %v775, %v1014
      %v1023 = vadd.f32 %v776, %v1016
      %v1024 = vxor.u32 %v1020, 2147483648
      %v1025 = vmul.f32 %v1024, 1.442695
      %v1026 = vpow.pop %v1025
      %v1027 = vadd.f32 %v1026, 1.0
      %v1028 = vrcp.pop %v1027
      %v1029 = vmul.f32 1.0, %v1028
      %v1030 = vxor.u32 %v1021, 2147483648
      %v1031 = vmul.f32 %v1030, 1.442695
      %v1032 = vpow.pop %v1031
      %v1033 = vadd.f32 %v1032, 1.0
      %v1034 = vrcp.pop %v1033
      %v1035 = vmul.f32 1.0, %v1034
      %v1036 = vtanh.pop %v1022
      %v1037 = vxor.u32 %v1023, 2147483648
      %v1038 = vmul.f32 %v1037, 1.442695
      %v1039 = vpow.pop %v1038
      %v1040 = vadd.f32 %v1039, 1.0
      %v1041 = vrcp.pop %v1040
      %v1042 = vmul.f32 1.0, %v1041
      %v1043 = vmul.f32 %v1035, %v766
      %v1044 = vmul.f32 %v1029, %v1036
      %v1045 = vadd.f32 %v1043, %v1044
      %v1046 = vtanh.pop %v1045
      %v1047 = vmul.f32 %v1042, %v1046
    $region30: #{tpu_custom_call.1} parent=1 // loop_footer
      %s764 = sadd.s32 1, %s760
    $region31: #{tpu_custom_call.1} parent=1 // loop_footer_branch
      %759 = sbr.rel target = $region27
    $region32: #{tpu_custom_call.1} parent=1 // loop_exit
      _
    %1048 = vst [vmem:[#allocation2] sm:$0xff] %v765
    %1049 = vst [vmem:[#allocation3] sm:$0xff] %v766
    // Predicated region
    $region33: #{tpu_custom_call.1} parent=1 // pred_check
      %p1050 = pneg %p66
    $region34: #{tpu_custom_call.1} parent=1 // pred_check_branch
      %1052 = sbr.rel (%p1050) target = $region36
    $region35: #{tpu_custom_call.1} parent=1 // pred_region
      %v1053 = vld [vmem:[#allocation2] sm:$0xff]
      %1054 = vst [vmem:[#allocation10] sm:$0xff] %v1053
    $region36: #{tpu_custom_call.1} parent=1 // pred_fallthru
      _
    // Predicated region
    $region37: #{tpu_custom_call.1} parent=1 // pred_check
      _
    $region38: #{tpu_custom_call.1} parent=1 // pred_check_branch
      %1056 = sbr.rel (0) target = $region40
    $region39: #{tpu_custom_call.1} parent=1 // pred_region
      %s1058 = ssub.s32 128, 128
      %1059 = vsyncadd [#allocation7], %s1058
      %s1061 = sshll.u32 [#allocation10], 4
      %s1062 = int_to_ptr.vmem [resolvable:$true] %s1061
      %1064 = dma.vmem_to_hbm [thread:$0]  %s1062, 128, %s3, [#allocation7]
    $region40: #{tpu_custom_call.1} parent=1 // pred_fallthru
      _
    // Predicated region
    $region41: #{tpu_custom_call.1} parent=1 // pred_check
      _
    $region42: #{tpu_custom_call.1} parent=1 // pred_check_branch
      %1066 = sbr.rel (0) target = $region44
    $region43: #{tpu_custom_call.1} parent=1 // pred_region
      %1067 = dma.done [#allocation7], 128
    $region44: #{tpu_custom_call.1} parent=1 // pred_fallthru
      _
    %1068 = vsyncpa [#allocation6], 1
    %1069 = vsyncpa [#allocation9], 1
    %1070 = vsyncpa [#allocation7], 1

</llo_original>
